<compile_context>
chip_gen: v7x
topology: tpu7x:2x2x1
jax: 0.10.0
libtpu: 0.0.40
codegen_flags: <defaults>
</compile_context>

<pallas_src>
import math

import jax
import jax.numpy as jnp
import numpy as np
from jax.experimental import pallas as pl
from jax.experimental.pallas import tpu as pltpu


def _round_up(x: int, m: int) -> int:
    return (x + m - 1) // m * m


def _attention_coupling_kernel(gpcm_ref, coral_ref, wbd_ref, mbd_ref, consts_ref, out_ref):
    # Packed layout: each 128-lane row holds G = 128/E consecutive logical rows,
    # each occupying E consecutive lanes.
    g = gpcm_ref[...].astype(jnp.float32)        # (T, 128)
    c = coral_ref[...].astype(jnp.float32)       # (T, 128)
    wbd = wbd_ref[...]                           # (128, 128) = kron(I_G, (Wo@Wv)^T)
    mbd = mbd_ref[...]                           # (128, 128) = kron(I_G, ones(E,E)/E)
    consts = consts_ref[...]                     # (3, 128): [bf | gamma | beta], lane-tiled
    bf = consts[0:1, :]
    gamma = consts[1:2, :]
    beta = consts[2:3, :]

    # attended = coral @ (Wo@Wv)^T + bf  -- block-diagonal weight on the MXU.
    attended = jnp.dot(c, wbd, preferred_element_type=jnp.float32)
    y = attended + bf + g                        # residual

    # LayerNorm over each logical row (= group of E lanes).  The block-diagonal
    # ones/E matmul returns the per-group mean broadcast to every lane of the
    # group, so no cross-lane VPU/XLU shuffles are needed.
    mean = jnp.dot(y, mbd, preferred_element_type=jnp.float32)
    d = y - mean
    var = jnp.dot(d * d, mbd, preferred_element_type=jnp.float32)
    normed = d * jax.lax.rsqrt(var + 1e-5)
    out_ref[...] = (normed * gamma + beta).astype(out_ref.dtype)


def attention_coupling(gpcm_betas, coral_taus, params, *, row_tile=4096):
    """gpcm_betas, coral_taus: (B, S, E).

    Returns (coupled (B, S, E), {'attention_weights': (B*S, 1, 1)}).
    """
    B, S, E = gpcm_betas.shape
    N = B * S
    if 128 % E != 0:
        # TODO(synk): general n_thresholds needs lane-padding of E or the (E, N)
        # transposed layout; this kernel covers power-of-two E <= 128.
        raise NotImplementedError("Pallas AttentionCoupling requires 128 % n_thresholds == 0")
    G = 128 // E  # logical rows packed per 128-lane vreg row

    # --- fold the attention path (softmax over the size-1 key axis == 1.0):
    #       attended = coral @ (Wo @ Wv)^T + (Wo @ bv + bo)
    hp = jax.lax.Precision.HIGHEST
    wf = jnp.dot(params["wo"], params["wv"], precision=hp).astype(jnp.float32)           # (E, E)
    bf = (jnp.dot(params["wo"], params["bv"], precision=hp) + params["bo"]).astype(jnp.float32)
    eye_g = jnp.eye(G, dtype=jnp.float32)
    wbd = jnp.kron(eye_g, wf.T)                                                          # (128, 128)
    mbd = jnp.kron(eye_g, jnp.full((E, E), 1.0 / E, dtype=jnp.float32))                  # (128, 128)
    consts = jnp.stack([
        jnp.tile(bf, G),
        jnp.tile(params["ln_gamma"].astype(jnp.float32), G),
        jnp.tile(params["ln_beta"].astype(jnp.float32), G),
    ])                                                                                   # (3, 128)

    # --- free, row-major reshape to a lane-dense (M, 128) slab. A copy only
    # happens for tiny/ragged N (tail pad of < 8*G logical rows).
    pad_unit = 8 * G if N < 8 * G else G
    pad_rows = (-N) % pad_unit
    gp = gpcm_betas.reshape(N, E)
    cp = coral_taus.reshape(N, E)
    if pad_rows:
        gp = jnp.pad(gp, ((0, pad_rows), (0, 0)))
        cp = jnp.pad(cp, ((0, pad_rows), (0, 0)))
    M = (N + pad_rows) // G
    gp = gp.reshape(M, 128)
    cp = cp.reshape(M, 128)

    # --- tiling: big tiles to amortize per-step overhead, but >=2 grid steps
    # whenever there is more than one sublane tile (v7x megacore sharding).
    if M <= 8:
        tile_rows = M
    else:
        tile_rows = max(8, min(_round_up(int(row_tile), 8), _round_up(pl.cdiv(M, 2), 8)))
    grid = (pl.cdiv(M, tile_rows),)

    tile_bytes = tile_rows * 128 * 4
    vmem_limit = int(min(100 * 1024 * 1024,
                         max(32 * 1024 * 1024, 6 * tile_bytes + (2 << 20))))

    data_spec = pl.BlockSpec((tile_rows, 128), lambda i: (i, 0))
    weight_spec = pl.BlockSpec((128, 128), lambda i: (0, 0))   # constant block -> fetched once
    consts_spec = pl.BlockSpec((3, 128), lambda i: (0, 0))

    coupled_p = pl.pallas_call(
        _attention_coupling_kernel,
        out_shape=jax.ShapeDtypeStruct((M, 128), gpcm_betas.dtype),
        grid_spec=pltpu.PrefetchScalarGridSpec(
            num_scalar_prefetch=0,
            grid=grid,
            in_specs=[data_spec, data_spec, weight_spec, weight_spec, consts_spec],
            out_specs=data_spec,
        ),
        compiler_params=pltpu.CompilerParams(
            dimension_semantics=("parallel",),
            vmem_limit_bytes=vmem_limit,
        ),
    )(gp, cp, wbd, mbd, consts)

    if pad_rows:
        coupled = coupled_p.reshape(-1, E)[:N].reshape(B, S, E)
    else:
        coupled = coupled_p.reshape(B, S, E)

    # Attention weights over a single key position are identically 1.0.
    attention_weights = jnp.ones((N, 1, 1), dtype=jnp.float32)
    return coupled, {"attention_weights": attention_weights}


def init_params(key, n_thresholds):
    """Deterministic synthetic parameters (shapes match nn.MultiheadAttention + LayerNorm)."""
    E = n_thresholds
    ks = jax.random.split(key, 6)
    # in_proj_weight is (3E, E) in PyTorch; split into q/k/v blocks.
    in_proj_w = jax.random.normal(ks[0], (3 * E, E), jnp.float32) / math.sqrt(E)
    in_proj_b = 0.1 * jax.random.normal(ks[1], (3 * E,), jnp.float32)
    out_w = jax.random.normal(ks[2], (E, E), jnp.float32) / math.sqrt(E)
    out_b = 0.1 * jax.random.normal(ks[3], (E,), jnp.float32)
    gamma = 1.0 + 0.1 * jax.random.normal(ks[4], (E,), jnp.float32)
    beta = 0.1 * jax.random.normal(ks[5], (E,), jnp.float32)
    return {
        "wq": in_proj_w[:E], "wk": in_proj_w[E:2 * E], "wv": in_proj_w[2 * E:],
        "bq": in_proj_b[:E], "bk": in_proj_b[E:2 * E], "bv": in_proj_b[2 * E:],
        "wo": out_w, "bo": out_b,
        "ln_gamma": gamma, "ln_beta": beta,
    }


def _reference(gpcm, coral, params):
    """Pure-JAX reference of the PyTorch forward (un-fused, exact-f32 matmuls)."""
    hp = jax.lax.Precision.HIGHEST
    B, S, E = gpcm.shape
    g = gpcm.reshape(-1, E)
    c = coral.reshape(-1, E)
    qp = jnp.dot(g, params["wq"].T, precision=hp) + params["bq"]
    kp = jnp.dot(c, params["wk"].T, precision=hp) + params["bk"]
    vp = jnp.dot(c, params["wv"].T, precision=hp) + params["bv"]
    scores = jnp.sum(qp * kp, axis=-1, keepdims=True) / math.sqrt(E)
    w = jax.nn.softmax(scores, axis=-1)  # size-1 key axis -> 1.0
    attended = jnp.dot(w * vp, params["wo"].T, precision=hp) + params["bo"]
    y = attended.reshape(B, S, E) + gpcm
    mean = jnp.mean(y, axis=-1, keepdims=True)
    var = jnp.mean((y - mean) ** 2, axis=-1, keepdims=True)
    coupled = (y - mean) / jnp.sqrt(var + 1e-5) * params["ln_gamma"] + params["ln_beta"]
    return coupled, w.reshape(-1, 1, 1)


if __name__ == "__main__":
    key = jax.random.PRNGKey(0)
    k_p, k_g, k_c = jax.random.split(key, 3)

    B, S, E = 2, 64, 8  # batch=2, seq=64, n_thresholds=8  (B*S*E = 1024 -> clean (8,128) slab)
    params = init_params(k_p, E)
    gpcm_betas = jax.random.normal(k_g, (B, S, E), jnp.float32)
    coral_taus = jax.random.normal(k_c, (B, S, E), jnp.float32)

    coupled, extras = jax.jit(attention_coupling)(gpcm_betas, coral_taus, params)
    coupled = jax.block_until_ready(coupled)
    attn_w = jax.block_until_ready(extras["attention_weights"])

    ref_coupled, ref_w = _reference(gpcm_betas, coral_taus, params)
    assert coupled.shape == (B, S, E)
    assert attn_w.shape == (B * S, 1, 1)
    # Tolerance accounts for MXU f32 matmul rounding (the transform and the LN
    # mean/var run as MXU matmuls, whose bf16-pass decomposition / summation
    # order differs from the exact-f32 reference); structural errors would be O(1).
    np.testing.assert_allclose(np.asarray(coupled), np.asarray(ref_coupled), atol=2e-2, rtol=2e-2)
    np.testing.assert_allclose(np.asarray(attn_w), np.asarray(ref_w), atol=1e-6, rtol=1e-6)
    print("KERNEL_OK")
</pallas_src>

<mosaic_0001>
module attributes {stable_mosaic.version = 11 : i64} {
  func.func @_attention_coupling_kernel(%arg0: i32, %arg1: memref<8x128xf32, #tpu.memory_space<vmem>>, %arg2: memref<8x128xf32, #tpu.memory_space<vmem>>, %arg3: memref<128x128xf32, #tpu.memory_space<vmem>>, %arg4: memref<128x128xf32, #tpu.memory_space<vmem>>, %arg5: memref<3x128xf32, #tpu.memory_space<vmem>>, %arg6: memref<8x128xf32, #tpu.memory_space<vmem>>) attributes {dimension_semantics = [#tpu.dimension_semantics<parallel>], iteration_bounds = array<i64: 1>, scalar_prefetch = 0 : i64, scratch_operands = 0 : i64, tpu.core_type = #tpu.core_type<tc>, window_params = [{transform_indices = @transform_0, window_bounds = array<i64: 8, 128>}, {transform_indices = @transform_1, window_bounds = array<i64: 8, 128>}, {pipeline_mode = #tpu.pipeline_mode<synchronous>, transform_indices = @transform_2, window_bounds = array<i64: 128, 128>}, {pipeline_mode = #tpu.pipeline_mode<synchronous>, transform_indices = @transform_3, window_bounds = array<i64: 128, 128>}, {pipeline_mode = #tpu.pipeline_mode<synchronous>, transform_indices = @transform_4, window_bounds = array<i64: 3, 128>}, {transform_indices = @transform_5, window_bounds = array<i64: 8, 128>}]} {
    %c0 = arith.constant 0 : index
    %c0_0 = arith.constant 0 : index
    %0 = vector.load %arg1[%c0, %c0_0] : memref<8x128xf32, #tpu.memory_space<vmem>>, vector<8x128xf32>
    %c0_1 = arith.constant 0 : index
    %c0_2 = arith.constant 0 : index
    %1 = vector.load %arg2[%c0_1, %c0_2] : memref<8x128xf32, #tpu.memory_space<vmem>>, vector<8x128xf32>
    %c0_3 = arith.constant 0 : index
    %c0_4 = arith.constant 0 : index
    %2 = vector.load %arg3[%c0_3, %c0_4] : memref<128x128xf32, #tpu.memory_space<vmem>>, vector<128x128xf32>
    %c0_5 = arith.constant 0 : index
    %c0_6 = arith.constant 0 : index
    %3 = vector.load %arg4[%c0_5, %c0_6] : memref<128x128xf32, #tpu.memory_space<vmem>>, vector<128x128xf32>
    %c0_7 = arith.constant 0 : index
    %c0_8 = arith.constant 0 : index
    %4 = vector.load %arg5[%c0_7, %c0_8] : memref<3x128xf32, #tpu.memory_space<vmem>>, vector<3x128xf32>
    %5 = vector.extract_strided_slice %4 {offsets = [0, 0], sizes = [1, 128], strides = [1, 1]} : vector<3x128xf32> to vector<1x128xf32>
    %6 = vector.extract_strided_slice %4 {offsets = [1, 0], sizes = [1, 128], strides = [1, 1]} : vector<3x128xf32> to vector<1x128xf32>
    %7 = vector.extract_strided_slice %4 {offsets = [2, 0], sizes = [1, 128], strides = [1, 1]} : vector<3x128xf32> to vector<1x128xf32>
    %cst = arith.constant dense<0.000000e+00> : vector<8x128xf32>
    %8 = tpu.matmul %1, %2, %cst {dimension_numbers = #tpu.dot_dimension_numbers<[1], [0], [0], [1], [0, 0, 1, 1], [], []>} : vector<8x128xf32>, vector<128x128xf32>, vector<8x128xf32> -> vector<8x128xf32>
    %9 = vector.broadcast %5 : vector<1x128xf32> to vector<8x128xf32>
    %10 = arith.addf %8, %9 : vector<8x128xf32>
    %11 = arith.addf %10, %0 : vector<8x128xf32>
    %cst_9 = arith.constant dense<0.000000e+00> : vector<8x128xf32>
    %12 = tpu.matmul %11, %3, %cst_9 {dimension_numbers = #tpu.dot_dimension_numbers<[1], [0], [0], [1], [0, 0, 1, 1], [], []>} : vector<8x128xf32>, vector<128x128xf32>, vector<8x128xf32> -> vector<8x128xf32>
    %13 = arith.subf %11, %12 : vector<8x128xf32>
    %14 = arith.mulf %13, %13 : vector<8x128xf32>
    %cst_10 = arith.constant dense<0.000000e+00> : vector<8x128xf32>
    %15 = tpu.matmul %14, %3, %cst_10 {dimension_numbers = #tpu.dot_dimension_numbers<[1], [0], [0], [1], [0, 0, 1, 1], [], []>} : vector<8x128xf32>, vector<128x128xf32>, vector<8x128xf32> -> vector<8x128xf32>
    %cst_11 = arith.constant 9.99999974E-6 : f32
    %16 = vector.broadcast %cst_11 : f32 to vector<8x128xf32>
    %17 = arith.addf %15, %16 : vector<8x128xf32>
    %18 = math.rsqrt %17 : vector<8x128xf32>
    %19 = arith.mulf %13, %18 : vector<8x128xf32>
    %20 = vector.broadcast %6 : vector<1x128xf32> to vector<8x128xf32>
    %21 = arith.mulf %19, %20 : vector<8x128xf32>
    %22 = vector.broadcast %7 : vector<1x128xf32> to vector<8x128xf32>
    %23 = arith.addf %21, %22 : vector<8x128xf32>
    %c0_12 = arith.constant 0 : index
    %c0_13 = arith.constant 0 : index
    %24 = vector.load %arg6[%c0_12, %c0_13] : memref<8x128xf32, #tpu.memory_space<vmem>>, vector<8x128xf32>
    tpu.vector_store %arg6[%c0_12, %c0_13], %23 {strides = array<i32>} : memref<8x128xf32, #tpu.memory_space<vmem>>, vector<8x128xf32>,
    return
  }
  func.func @transform_0(%arg0: i32) -> (i32, i32) {
    %c0_i32 = arith.constant 0 : i32
    %c0_i32_0 = arith.constant 0 : i32
    return %arg0, %c0_i32 : i32, i32
  }
  func.func @transform_1(%arg0: i32) -> (i32, i32) {
    %c0_i32 = arith.constant 0 : i32
    %c0_i32_0 = arith.constant 0 : i32
    return %arg0, %c0_i32 : i32, i32
  }
  func.func @transform_2(%arg0: i32) -> (i32, i32) {
    %c0_i32 = arith.constant 0 : i32
    %c0_i32_0 = arith.constant 0 : i32
    %c0_i32_1 = arith.constant 0 : i32
    return %c0_i32, %c0_i32_0 : i32, i32
  }
  func.func @transform_3(%arg0: i32) -> (i32, i32) {
    %c0_i32 = arith.constant 0 : i32
    %c0_i32_0 = arith.constant 0 : i32
    %c0_i32_1 = arith.constant 0 : i32
    return %c0_i32, %c0_i32_0 : i32, i32
  }
  func.func @transform_4(%arg0: i32) -> (i32, i32) {
    %c0_i32 = arith.constant 0 : i32
    %c0_i32_0 = arith.constant 0 : i32
    %c0_i32_1 = arith.constant 0 : i32
    return %c0_i32, %c0_i32_0 : i32, i32
  }
  func.func @transform_5(%arg0: i32) -> (i32, i32) {
    %c0_i32 = arith.constant 0 : i32
    %c0_i32_0 = arith.constant 0 : i32
    return %arg0, %c0_i32 : i32, i32
  }
}

</mosaic_0001>

<llo_original>
// kernel: tile.18
$region0: #{tile.18}
  #allocation0 [shape = 's32[1]{0}', space=sflag, size = 0x4, scoped, tag = 'scoped memory for tile.18']
  %s0 = inlined_call_operand.vmem [shape: f32[8], index: 0, kind: input, shape index: {}]
  %s1 = inlined_call_operand.vmem [shape: f32[16,8], index: 1, kind: output, shape index: {}]
  // Predicated region
  $region2: #{tile.18} parent=0 // pred_check
    _
  $region3: #{tile.18} parent=0 // pred_check_branch
    %3 = sbr.rel (0) target = $region5
  $region4: #{tile.18} parent=0 // pred_region
    _
  $region5: #{tile.18} parent=0 // pred_fallthru
    _
  %v4 = vld [vmem:[%s0] ss:$0 sm:$0xff]
  %5 = vst [vmem:[%s1] sm:$0xff] %v4
  %s6 = scalar_lea.vmem %s1, 8
  %7 = vst [vmem:[%s6] sm:$0xff] %v4

// kernel: tile.27
$region0: #{tile.27}
  %s0 = inlined_call_operand.vmem [shape: f32[16,8], index: 0, kind: input, shape index: {}]
  %s1 = inlined_call_operand.vmem [shape: f32[1,128], index: 1, kind: output, shape index: {}]
  $region1: #{tile.27} parent=0
    #allocation0 [shape = 'u8[4096]{0}', space=vmem, size = 0x1000, scoped, tag = 'scoped mem for output reshape']
    %v2 = vld [vmem:[%s0] sm:$0x1]
    %vm3 = vcmask 64512
    %4 = vst.msk [vmem:[#allocation0] sm:$0x1] %vm3, %v2
    %s5 = scalar_lea.vmem %s0, 15
    %v6 = vld [vmem:[%s5] sm:$0x1]
    %7 = vrot.lane.b32.xlu0 %v6, 120
    %v8 = vpop.permute.xlu0 %7
    %vm9 = vcmask 1048512
    %10 = vst.msk [vmem:[#allocation0] sm:$0x1] %vm9, %v8
    %s11 = scalar_lea.vmem %s0, 14
    %v12 = vld [vmem:[%s11] sm:$0x1]
    %13 = vrot.lane.b32.xlu0 %v12, 112
    %v14 = vpop.permute.xlu0 %13
    %vm15 = vcmask 982912
    %16 = vst.msk [vmem:[#allocation0] sm:$0x1] %vm15, %v14
    %s17 = scalar_lea.vmem %s0, 13
    %v18 = vld [vmem:[%s17] sm:$0x1]
    %19 = vrot.lane.b32.xlu0 %v18, 104
    %v20 = vpop.permute.xlu0 %19
    %vm21 = vcmask 917312
    %22 = vst.msk [vmem:[#allocation0] sm:$0x1] %vm21, %v20
    %s23 = scalar_lea.vmem %s0, 12
    %v24 = vld [vmem:[%s23] sm:$0x1]
    %25 = vrot.lane.b32.xlu0 %v24, 96
    %v26 = vpop.permute.xlu0 %25
    %vm27 = vcmask 851712
    %28 = vst.msk [vmem:[#allocation0] sm:$0x1] %vm27, %v26
    %s29 = scalar_lea.vmem %s0, 11
    %v30 = vld [vmem:[%s29] sm:$0x1]
    %31 = vrot.lane.b32.xlu0 %v30, 88
    %v32 = vpop.permute.xlu0 %31
    %vm33 = vcmask 786112
    %34 = vst.msk [vmem:[#allocation0] sm:$0x1] %vm33, %v32
    %s35 = scalar_lea.vmem %s0, 10
    %v36 = vld [vmem:[%s35] sm:$0x1]
    %37 = vrot.lane.b32.xlu0 %v36, 80
    %v38 = vpop.permute.xlu0 %37
    %vm39 = vcmask 720512
    %40 = vst.msk [vmem:[#allocation0] sm:$0x1] %vm39, %v38
    %s41 = scalar_lea.vmem %s0, 9
    %v42 = vld [vmem:[%s41] sm:$0x1]
    %43 = vrot.lane.b32.xlu0 %v42, 72
    %v44 = vpop.permute.xlu0 %43
    %vm45 = vcmask 654912
    %46 = vst.msk [vmem:[#allocation0] sm:$0x1] %vm45, %v44
    %s47 = scalar_lea.vmem %s0, 8
    %v48 = vld [vmem:[%s47] sm:$0x1]
    %49 = vrot.lane.b32.xlu0 %v48, 64
    %v50 = vpop.permute.xlu0 %49
    %vm51 = vcmask 589312
    %52 = vst.msk [vmem:[#allocation0] sm:$0x1] %vm51, %v50
    %s53 = scalar_lea.vmem %s0, 7
    %v54 = vld [vmem:[%s53] sm:$0x1]
    %55 = vrot.lane.b32.xlu0 %v54, 56
    %v56 = vpop.permute.xlu0 %55
    %vm57 = vcmask 523712
    %58 = vst.msk [vmem:[#allocation0] sm:$0x1] %vm57, %v56
    %s59 = scalar_lea.vmem %s0, 6
    %v60 = vld [vmem:[%s59] sm:$0x1]
    %61 = vrot.lane.b32.xlu0 %v60, 48
    %v62 = vpop.permute.xlu0 %61
    %vm63 = vcmask 458112
    %64 = vst.msk [vmem:[#allocation0] sm:$0x1] %vm63, %v62
    %s65 = scalar_lea.vmem %s0, 5
    %v66 = vld [vmem:[%s65] sm:$0x1]
    %67 = vrot.lane.b32.xlu0 %v66, 40
    %v68 = vpop.permute.xlu0 %67
    %vm69 = vcmask 392512
    %70 = vst.msk [vmem:[#allocation0] sm:$0x1] %vm69, %v68
    %s71 = scalar_lea.vmem %s0, 4
    %v72 = vld [vmem:[%s71] sm:$0x1]
    %73 = vrot.lane.b32.xlu0 %v72, 32
    %v74 = vpop.permute.xlu0 %73
    %vm75 = vcmask 326912
    %76 = vst.msk [vmem:[#allocation0] sm:$0x1] %vm75, %v74
    %s77 = scalar_lea.vmem %s0, 3
    %v78 = vld [vmem:[%s77] sm:$0x1]
    %79 = vrot.lane.b32.xlu0 %v78, 24
    %v80 = vpop.permute.xlu0 %79
    %vm81 = vcmask 261312
    %82 = vst.msk [vmem:[#allocation0] sm:$0x1] %vm81, %v80
    %s83 = scalar_lea.vmem %s0, 2
    %v84 = vld [vmem:[%s83] sm:$0x1]
    %85 = vrot.lane.b32.xlu0 %v84, 16
    %v86 = vpop.permute.xlu0 %85
    %vm87 = vcmask 195712
    %88 = vst.msk [vmem:[#allocation0] sm:$0x1] %vm87, %v86
    %s89 = scalar_lea.vmem %s0, 1
    %v90 = vld [vmem:[%s89] sm:$0x1]
    %91 = vrot.lane.b32.xlu0 %v90, 8
    %v92 = vpop.permute.xlu0 %91
    %vm93 = vcmask 130112
    %94 = vst.msk [vmem:[#allocation0] sm:$0x1] %vm93, %v92
    %s96 = sshllo.u32 0, 1
    %v98 = vld [vmem:[#allocation0] sm:%s96]
    %s99 = sshllo.u32 0, 1
    %100 = vst [vmem:[%s1] sm:%s99] %v98

// kernel: attention_coupling.1
$region0: #{attention_coupling.1}
  #allocation0 [shape = 'u32[]', space=smem, size = 0x4, offset = 0x4, fixed_abs, tag = 'smem constant byte address 0x4 - core index']
  #allocation1 [shape = 'u32[144,128]{1,0:T(1,128)}', space=vmem, size = 0x12000, scoped, tag = 'internal scratch']
  %s0 = inlined_call_operand.vmem [shape: f32[8,128], index: 0, kind: input, shape index: {}]
  %s1 = inlined_call_operand.vmem [shape: f32[8,128], index: 1, kind: input, shape index: {}]
  %s2 = inlined_call_operand.vmem [shape: f32[128,128], index: 2, kind: input, shape index: {}]
  %s3 = inlined_call_operand.vmem [shape: f32[128,128], index: 3, kind: input, shape index: {}]
  %s4 = inlined_call_operand.vmem [shape: f32[3,128], index: 4, kind: input, shape index: {}]
  %s5 = inlined_call_operand.vmem [shape: f32[8,128], index: 5, kind: output, shape index: {}]
  %s6 = sld [smem:[#allocation0]]
  $region30: #{attention_coupling.1} parent=0
    _
  %s8 = ssub.s32 1, %s6
  %s9 = scalar_select 0, %s8, %s6
  // Predicated region
  $region2: #{attention_coupling.1} parent=0 // pred_check
    _
  $region3: #{attention_coupling.1} parent=0 // pred_check_branch
    %11 = sbr.rel (0) target = $region5
  $region4: #{attention_coupling.1} parent=0 // pred_region
    _
  $region5: #{attention_coupling.1} parent=0 // pred_fallthru
    _
  // Predicated region
  $region6: #{attention_coupling.1} parent=0 // pred_check
    _
  $region7: #{attention_coupling.1} parent=0 // pred_check_branch
    %13 = sbr.rel (0) target = $region9
  $region8: #{attention_coupling.1} parent=0 // pred_region
    _
  $region9: #{attention_coupling.1} parent=0 // pred_fallthru
    _
  // Predicated region
  $region10: #{attention_coupling.1} parent=0 // pred_check
    _
  $region11: #{attention_coupling.1} parent=0 // pred_check_branch
    %15 = sbr.rel (0) target = $region13
  $region12: #{attention_coupling.1} parent=0 // pred_region
    _
  $region13: #{attention_coupling.1} parent=0 // pred_fallthru
    _
  // Predicated region
  $region14: #{attention_coupling.1} parent=0 // pred_check
    _
  $region15: #{attention_coupling.1} parent=0 // pred_check_branch
    %17 = sbr.rel (0) target = $region17
  $region16: #{attention_coupling.1} parent=0 // pred_region
    _
  $region17: #{attention_coupling.1} parent=0 // pred_fallthru
    _
  // Predicated region
  $region18: #{attention_coupling.1} parent=0 // pred_check
    _
  $region19: #{attention_coupling.1} parent=0 // pred_check_branch
    %19 = sbr.rel (0) target = $region21
  $region20: #{attention_coupling.1} parent=0 // pred_region
    _
  $region21: #{attention_coupling.1} parent=0 // pred_fallthru
    _
  %v20 = vld [vmem:[%s0] sm:$0xff]
  %v21 = vld [vmem:[%s1] sm:$0xff]
  %v22 = vld [vmem:[%s2] sm:$0xff]
  %v23 = vld [vmem:[%s2 + $0x8] sm:$0xff]
  %v24 = vld [vmem:[%s2 + $0x10] sm:$0xff]
  %v25 = vld [vmem:[%s2 + $0x18] sm:$0xff]
  %v26 = vld [vmem:[%s2 + $0x20] sm:$0xff]
  %v27 = vld [vmem:[%s2 + $0x28] sm:$0xff]
  %v28 = vld [vmem:[%s2 + $0x30] sm:$0xff]
  %v29 = vld [vmem:[%s2 + $0x38] sm:$0xff]
  %v30 = vld [vmem:[%s2 + $0x40] sm:$0xff]
  %v31 = vld [vmem:[%s2 + $0x48] sm:$0xff]
  %v32 = vld [vmem:[%s2 + $0x50] sm:$0xff]
  %v33 = vld [vmem:[%s2 + $0x58] sm:$0xff]
  %v34 = vld [vmem:[%s2 + $0x60] sm:$0xff]
  %v35 = vld [vmem:[%s2 + $0x68] sm:$0xff]
  %v36 = vld [vmem:[%s2 + $0x70] sm:$0xff]
  %v37 = vld [vmem:[%s2 + $0x78] sm:$0xff]
  %v38 = vld [vmem:[%s3] sm:$0xff]
  %v39 = vld [vmem:[%s3 + $0x8] sm:$0xff]
  %v40 = vld [vmem:[%s3 + $0x10] sm:$0xff]
  %v41 = vld [vmem:[%s3 + $0x18] sm:$0xff]
  %v42 = vld [vmem:[%s3 + $0x20] sm:$0xff]
  %v43 = vld [vmem:[%s3 + $0x28] sm:$0xff]
  %v44 = vld [vmem:[%s3 + $0x30] sm:$0xff]
  %v45 = vld [vmem:[%s3 + $0x38] sm:$0xff]
  %v46 = vld [vmem:[%s3 + $0x40] sm:$0xff]
  %v47 = vld [vmem:[%s3 + $0x48] sm:$0xff]
  %v48 = vld [vmem:[%s3 + $0x50] sm:$0xff]
  %v49 = vld [vmem:[%s3 + $0x58] sm:$0xff]
  %v50 = vld [vmem:[%s3 + $0x60] sm:$0xff]
  %v51 = vld [vmem:[%s3 + $0x68] sm:$0xff]
  %v52 = vld [vmem:[%s3 + $0x70] sm:$0xff]
  %v53 = vld [vmem:[%s3 + $0x78] sm:$0xff]
  %v54 = vld [vmem:[%s4] sm:$0x7]
  %v55 = vlaneseq
  %v56 = vshrl.u32 %v55, 7
  %v57 = vsub.s32 0, %v56
  %v58 = vrot.slane %v54, %v57
  %59 = vmatprep.subr.mxu0 0.0
  %60 = vmatpush1.msra.mxu0 %v22
  %61 = vmatprep.subr.mxu0 0.0
  %62 = vmatpush1.msra.mxu0 %v23
  %63 = vmatprep.subr.mxu0 0.0
  %64 = vmatpush1.msra.mxu0 %v24
  %65 = vmatprep.subr.mxu0 0.0
  %66 = vmatpush1.msra.mxu0 %v25
  %67 = vmatprep.subr.mxu0 0.0
  %68 = vmatpush1.msra.mxu0 %v26
  %69 = vmatprep.subr.mxu0 0.0
  %70 = vmatpush1.msra.mxu0 %v27
  %71 = vmatprep.subr.mxu0 0.0
  %72 = vmatpush1.msra.mxu0 %v28
  %73 = vmatprep.subr.mxu0 0.0
  %74 = vmatpush1.msra.mxu0 %v29
  %75 = vmatprep.subr.mxu0 0.0
  %76 = vmatpush1.msra.mxu0 %v30
  %77 = vmatprep.subr.mxu0 0.0
  %78 = vmatpush1.msra.mxu0 %v31
  %79 = vmatprep.subr.mxu0 0.0
  %80 = vmatpush1.msra.mxu0 %v32
  %81 = vmatprep.subr.mxu0 0.0
  %82 = vmatpush1.msra.mxu0 %v33
  %83 = vmatprep.subr.mxu0 0.0
  %84 = vmatpush1.msra.mxu0 %v34
  %85 = vmatprep.subr.mxu0 0.0
  %86 = vmatpush1.msra.mxu0 %v35
  %87 = vmatprep.subr.mxu0 0.0
  %88 = vmatpush1.msra.mxu0 %v36
  %89 = vmatprep.subr.mxu0 0.0
  %90 = vmatpush1.msra.mxu0 %v37
  %91 = vmatprep.subr.mxu0 0.0
  %92 = vmatpush1.msra.mxu0 0.0
  %93 = vmatprep.subr.mxu0 0.0
  %94 = vmatpush1.msra.mxu0 0.0
  %95 = vmatprep.subr.mxu0 0.0
  %96 = vmatpush1.msra.mxu0 0.0
  %97 = vmatprep.subr.mxu0 0.0
  %98 = vmatpush1.msra.mxu0 0.0
  %99 = vmatprep.subr.mxu0 0.0
  %100 = vmatpush1.msra.mxu0 0.0
  %101 = vmatprep.subr.mxu0 0.0
  %102 = vmatpush1.msra.mxu0 0.0
  %103 = vmatprep.subr.mxu0 0.0
  %104 = vmatpush1.msra.mxu0 0.0
  %105 = vmatprep.subr.mxu0 0.0
  %106 = vmatpush1.msra.mxu0 0.0
  %107 = vmatprep.subr.mxu0 0.0
  %108 = vmatpush1.msra.mxu0 0.0
  %109 = vmatprep.subr.mxu0 0.0
  %110 = vmatpush1.msra.mxu0 0.0
  %111 = vmatprep.subr.mxu0 0.0
  %112 = vmatpush1.msra.mxu0 0.0
  %113 = vmatprep.subr.mxu0 0.0
  %114 = vmatpush1.msra.mxu0 0.0
  %115 = vmatprep.subr.mxu0 0.0
  %116 = vmatpush1.msra.mxu0 0.0
  %117 = vmatprep.subr.mxu0 0.0
  %118 = vmatpush1.msra.mxu0 0.0
  %119 = vmatprep.subr.mxu0 0.0
  %120 = vmatpush1.msra.mxu0 0.0
  %121 = vmatprep.subr.mxu0 0.0
  %122 = vmatpush1.msra.mxu0 0.0
  %123 = vmatprep.mubr.f32.mxu0 0.0
  %124 = vmatmul.mubr.f32.gmra.mrb[0].mxu0 %v21
  %v125 = vpop.f32.mrb[0].mxu0
  %v126 = vadd.f32 %v58, %v125
  %v127 = vpop.f32.mrb[0].mxu0
  %128 = vdwg.mxu0
  %v129 = vadd.f32 %v126, %v20
  %130 = vmatprep.subr.mxu0 0.0
  %131 = vmatpush1.msra.mxu0 %v38
  %132 = vmatprep.subr.mxu0 0.0
  %133 = vmatpush1.msra.mxu0 %v39
  %134 = vmatprep.subr.mxu0 0.0
  %135 = vmatpush1.msra.mxu0 %v40
  %136 = vmatprep.subr.mxu0 0.0
  %137 = vmatpush1.msra.mxu0 %v41
  %138 = vmatprep.subr.mxu0 0.0
  %139 = vmatpush1.msra.mxu0 %v42
  %140 = vmatprep.subr.mxu0 0.0
  %141 = vmatpush1.msra.mxu0 %v43
  %142 = vmatprep.subr.mxu0 0.0
  %143 = vmatpush1.msra.mxu0 %v44
  %144 = vmatprep.subr.mxu0 0.0
  %145 = vmatpush1.msra.mxu0 %v45
  %146 = vmatprep.subr.mxu0 0.0
  %147 = vmatpush1.msra.mxu0 %v46
  %148 = vmatprep.subr.mxu0 0.0
  %149 = vmatpush1.msra.mxu0 %v47
  %150 = vmatprep.subr.mxu0 0.0
  %151 = vmatpush1.msra.mxu0 %v48
  %152 = vmatprep.subr.mxu0 0.0
  %153 = vmatpush1.msra.mxu0 %v49
  %154 = vmatprep.subr.mxu0 0.0
  %155 = vmatpush1.msra.mxu0 %v50
  %156 = vmatprep.subr.mxu0 0.0
  %157 = vmatpush1.msra.mxu0 %v51
  %158 = vmatprep.subr.mxu0 0.0
  %159 = vmatpush1.msra.mxu0 %v52
  %160 = vmatprep.subr.mxu0 0.0
  %161 = vmatpush1.msra.mxu0 %v53
  %162 = vmatprep.subr.mxu0 0.0
  %163 = vmatpush1.msra.mxu0 0.0
  %164 = vmatprep.subr.mxu0 0.0
  %165 = vmatpush1.msra.mxu0 0.0
  %166 = vmatprep.subr.mxu0 0.0
  %167 = vmatpush1.msra.mxu0 0.0
  %168 = vmatprep.subr.mxu0 0.0
  %169 = vmatpush1.msra.mxu0 0.0
  %170 = vmatprep.subr.mxu0 0.0
  %171 = vmatpush1.msra.mxu0 0.0
  %172 = vmatprep.subr.mxu0 0.0
  %173 = vmatpush1.msra.mxu0 0.0
  %174 = vmatprep.subr.mxu0 0.0
  %175 = vmatpush1.msra.mxu0 0.0
  %176 = vmatprep.subr.mxu0 0.0
  %177 = vmatpush1.msra.mxu0 0.0
  %178 = vmatprep.subr.mxu0 0.0
  %179 = vmatpush1.msra.mxu0 0.0
  %180 = vmatprep.subr.mxu0 0.0
  %181 = vmatpush1.msra.mxu0 0.0
  %182 = vmatprep.subr.mxu0 0.0
  %183 = vmatpush1.msra.mxu0 0.0
  %184 = vmatprep.subr.mxu0 0.0
  %185 = vmatpush1.msra.mxu0 0.0
  %186 = vmatprep.subr.mxu0 0.0
  %187 = vmatpush1.msra.mxu0 0.0
  %188 = vmatprep.subr.mxu0 0.0
  %189 = vmatpush1.msra.mxu0 0.0
  %190 = vmatprep.subr.mxu0 0.0
  %191 = vmatpush1.msra.mxu0 0.0
  %192 = vmatprep.subr.mxu0 0.0
  %193 = vmatpush1.msra.mxu0 0.0
  %194 = vmatprep.mubr.f32.mxu0 0.0
  %195 = vmatmul.mubr.f32.gmra.mrb[0].mxu0 %v129
  %v196 = vpop.f32.mrb[0].mxu0
  %v197 = vadd.f32 0.0, %v196
  %v198 = vpop.f32.mrb[0].mxu0
  %199 = vdwg.mxu0
  %v200 = vsub.f32 %v129, %v197
  %v201 = vmul.f32 %v200, %v200
  %202 = vmatprep.subr.mxu0 0.0
  %203 = vmatpush1.msra.mxu0 %v38
  %204 = vmatprep.subr.mxu0 0.0
  %205 = vmatpush1.msra.mxu0 %v39
  %206 = vmatprep.subr.mxu0 0.0
  %207 = vmatpush1.msra.mxu0 %v40
  %208 = vmatprep.subr.mxu0 0.0
  %209 = vmatpush1.msra.mxu0 %v41
  %210 = vmatprep.subr.mxu0 0.0
  %211 = vmatpush1.msra.mxu0 %v42
  %212 = vmatprep.subr.mxu0 0.0
  %213 = vmatpush1.msra.mxu0 %v43
  %214 = vmatprep.subr.mxu0 0.0
  %215 = vmatpush1.msra.mxu0 %v44
  %216 = vmatprep.subr.mxu0 0.0
  %217 = vmatpush1.msra.mxu0 %v45
  %218 = vmatprep.subr.mxu0 0.0
  %219 = vmatpush1.msra.mxu0 %v46
  %220 = vmatprep.subr.mxu0 0.0
  %221 = vmatpush1.msra.mxu0 %v47
  %222 = vmatprep.subr.mxu0 0.0
  %223 = vmatpush1.msra.mxu0 %v48
  %224 = vmatprep.subr.mxu0 0.0
  %225 = vmatpush1.msra.mxu0 %v49
  %226 = vmatprep.subr.mxu0 0.0
  %227 = vmatpush1.msra.mxu0 %v50
  %228 = vmatprep.subr.mxu0 0.0
  %229 = vmatpush1.msra.mxu0 %v51
  %230 = vmatprep.subr.mxu0 0.0
  %231 = vmatpush1.msra.mxu0 %v52
  %232 = vmatprep.subr.mxu0 0.0
  %233 = vmatpush1.msra.mxu0 %v53
  %234 = vmatprep.subr.mxu0 0.0
  %235 = vmatpush1.msra.mxu0 0.0
  %236 = vmatprep.subr.mxu0 0.0
  %237 = vmatpush1.msra.mxu0 0.0
  %238 = vmatprep.subr.mxu0 0.0
  %239 = vmatpush1.msra.mxu0 0.0
  %240 = vmatprep.subr.mxu0 0.0
  %241 = vmatpush1.msra.mxu0 0.0
  %242 = vmatprep.subr.mxu0 0.0
  %243 = vmatpush1.msra.mxu0 0.0
  %244 = vmatprep.subr.mxu0 0.0
  %245 = vmatpush1.msra.mxu0 0.0
  %246 = vmatprep.subr.mxu0 0.0
  %247 = vmatpush1.msra.mxu0 0.0
  %248 = vmatprep.subr.mxu0 0.0
  %249 = vmatpush1.msra.mxu0 0.0
  %250 = vmatprep.subr.mxu0 0.0
  %251 = vmatpush1.msra.mxu0 0.0
  %252 = vmatprep.subr.mxu0 0.0
  %253 = vmatpush1.msra.mxu0 0.0
  %254 = vmatprep.subr.mxu0 0.0
  %255 = vmatpush1.msra.mxu0 0.0
  %256 = vmatprep.subr.mxu0 0.0
  %257 = vmatpush1.msra.mxu0 0.0
  %258 = vmatprep.subr.mxu0 0.0
  %259 = vmatpush1.msra.mxu0 0.0
  %260 = vmatprep.subr.mxu0 0.0
  %261 = vmatpush1.msra.mxu0 0.0
  %262 = vmatprep.subr.mxu0 0.0
  %263 = vmatpush1.msra.mxu0 0.0
  %264 = vmatprep.subr.mxu0 0.0
  %265 = vmatpush1.msra.mxu0 0.0
  %266 = vmatprep.mubr.f32.mxu0 0.0
  %267 = vmatmul.mubr.f32.gmra.mrb[0].mxu0 %v201
  %v268 = vpop.f32.mrb[0].mxu0
  %v269 = vadd.f32 1e-05, %v268
  %v270 = vpop.f32.mrb[0].mxu0
  %271 = vdwg.mxu0
  %v272 = vrsqrt.pop %v269
  %v273 = vmul.f32 %v200, %v272
  %v274 = vlaneseq
  %v275 = vshrl.u32 %v274, 7
  %v276 = vsub.s32 1, %v275
  %v277 = vrot.slane %v54, %v276
  %v278 = vmul.f32 %v273, %v277
  %v279 = vlaneseq
  %v280 = vshrl.u32 %v279, 7
  %v281 = vsub.s32 2, %v280
  %v282 = vrot.slane %v54, %v281
  %v283 = vadd.f32 %v278, %v282
  %284 = vst [vmem:[%s5] sm:$0xff] %v283
  // Predicated region
  $region22: #{attention_coupling.1} parent=0 // pred_check
    _
  $region23: #{attention_coupling.1} parent=0 // pred_check_branch
    %286 = sbr.rel (0) target = $region25
  $region24: #{attention_coupling.1} parent=0 // pred_region
    _
  $region25: #{attention_coupling.1} parent=0 // pred_fallthru
    _
  // Predicated region
  $region26: #{attention_coupling.1} parent=0 // pred_check
    _
  $region27: #{attention_coupling.1} parent=0 // pred_check_branch
    %288 = sbr.rel (0) target = $region29
  $region28: #{attention_coupling.1} parent=0 // pred_region
    _
  $region29: #{attention_coupling.1} parent=0 // pred_fallthru
    _

</llo_original>
